<compile_context>
chip_gen: v7x
topology: tpu7x:2x2x1
jax: 0.10.0
libtpu: 0.0.40
codegen_flags: <defaults>
</compile_context>

<pallas_src>
import functools

import jax
import jax.numpy as jnp
from jax.experimental import pallas as pl
from jax.experimental.pallas import tpu as pltpu

LANE = 128      # vreg lane width (last dim)
SUBLANE = 8     # vreg sublane count for f32 (second-to-last dim)


def _round_up(x, m):
    return ((x + m - 1) // m) * m


def _mlp_chain_kernel(*refs):
    """refs = (x_ref, w1_ref, ..., wN_ref, out_ref); weights are (in_pad, out_pad).

    One batch tile per grid step; the whole layer chain runs on the MXU with
    all intermediates resident in VMEM/vregs.
    """
    x_ref = refs[0]
    w_refs = refs[1:-1]
    o_ref = refs[-1]
    h = x_ref[...]                          # native dtype; widening happens on the MXU
    for w_ref in w_refs:
        h = jnp.dot(h, w_ref[...], preferred_element_type=jnp.float32)
    o_ref[...] = h.astype(o_ref.dtype)


def prepare_weights(weights):
    """One-time layout fixup (do NOT call per forward).

    Takes PyTorch-convention weights (out, in); returns a list of (in_pad, out_pad)
    matrices, transposed and zero-padded so every dim is a multiple of 128 lanes.
    """
    padded = []
    for w in weights:
        w = jnp.asarray(w)
        out_d, in_d = w.shape
        wt = w.T                                            # (in, out)
        in_p = _round_up(in_d, LANE)
        out_p = _round_up(out_d, LANE)
        wt = jnp.pad(wt, ((0, in_p - in_d), (0, out_p - out_d)))
        padded.append(wt)
    return padded


@functools.partial(jax.jit, static_argnames=("dout",))
def linear_network_forward(x, padded_wts, *, dout):
    """Forward pass of LinearNetwork(widths, bias=False).

    x:           (batch, widths[0])
    padded_wts:  output of prepare_weights(weights) -- (in_pad, out_pad) each.
    dout:        widths[-1] (static), used to slice off lane padding.
    Returns:     (batch, dout)
    """
    batch, din = x.shape
    din_pad = padded_wts[0].shape[0]
    dout_pad = padded_wts[-1].shape[1]

    # Batch tile: 256 rows once the batch is MXU-sized (v6e/v7x 256x256 MXU),
    # otherwise the smallest sublane-aligned tile covering the batch.
    tm = 256 if batch >= 256 else _round_up(max(batch, 1), SUBLANE)
    batch_pad = _round_up(batch, tm)

    x_pad = jnp.pad(x, ((0, batch_pad - batch), (0, din_pad - din)))

    grid = (batch_pad // tm,)

    flops = 2 * batch_pad * sum(int(w.shape[0]) * int(w.shape[1]) for w in padded_wts)
    bytes_accessed = (
        x_pad.size * x_pad.dtype.itemsize
        + sum(int(w.size) * w.dtype.itemsize for w in padded_wts)
        + batch_pad * dout_pad * x.dtype.itemsize
    )

    in_specs = [pl.BlockSpec((tm, din_pad), lambda i: (i, 0))]            # batch-tiled x
    in_specs += [pl.BlockSpec(tuple(w.shape), lambda i: (0, 0))           # full-extent weights
                 for w in padded_wts]

    out = pl.pallas_call(
        _mlp_chain_kernel,
        out_shape=jax.ShapeDtypeStruct((batch_pad, dout_pad), x.dtype),
        grid=grid,
        in_specs=in_specs,
        out_specs=pl.BlockSpec((tm, dout_pad), lambda i: (i, 0)),         # lane-dense output
        compiler_params=pltpu.CompilerParams(
            dimension_semantics=("parallel",)),                          # megacore sharding
        cost_estimate=pl.CostEstimate(
            flops=flops, transcendentals=0, bytes_accessed=bytes_accessed),
    )(x_pad, *padded_wts)

    return out[:batch, :dout]

# TODO(synk): if any width grows far beyond VMEM (K >> a few K), add a K grid
# axis marked "arbitrary" with an f32 VMEM accumulator instead of keeping full
# weights resident (matters first on v7x's 64 MiB VMEM).


def init_linear_network_weights(key, widths, dtype=jnp.float32):
    """Deterministic init matching nn.Linear default: U(-1/sqrt(fan_in), 1/sqrt(fan_in))."""
    weights = []
    for i in range(len(widths) - 1):
        key, sub = jax.random.split(key)
        fan_in = widths[i]
        bound = 1.0 / float(fan_in) ** 0.5
        w = jax.random.uniform(sub, (widths[i + 1], widths[i]),
                               dtype=dtype, minval=-bound, maxval=bound)
        weights.append(w)
    return weights


def _reference_forward(x, weights):
    h = x
    for w in weights:
        h = h @ w.T
    return h


if __name__ == "__main__":
    key = jax.random.PRNGKey(0)
    widths = [32, 64, 48, 16]   # din=32, two hidden layers, dout=16 (depth=3)
    batch = 8

    k_x, k_w = jax.random.split(key)
    x = jax.random.normal(k_x, (batch, widths[0]), dtype=jnp.float32)
    weights = init_linear_network_weights(k_w, widths, dtype=jnp.float32)

    # One-time weight layout fixup (transpose + lane padding), reused every call.
    padded_wts = prepare_weights(weights)
    padded_wts = jax.block_until_ready(padded_wts)

    out = linear_network_forward(x, padded_wts, dout=widths[-1])
    out = jax.block_until_ready(out)

    ref = _reference_forward(x, weights)
    assert out.shape == (batch, widths[-1]), out.shape
    assert jnp.allclose(out, ref, atol=1e-4, rtol=1e-4), "mismatch vs reference"

    print("KERNEL_OK")
</pallas_src>

<mosaic_0001>
module attributes {stable_mosaic.version = 11 : i64} {
  func.func @_mlp_chain_kernel(%arg0: i32, %arg1: memref<8x128xf32, #tpu.memory_space<vmem>>, %arg2: memref<128x128xf32, #tpu.memory_space<vmem>>, %arg3: memref<128x128xf32, #tpu.memory_space<vmem>>, %arg4: memref<128x128xf32, #tpu.memory_space<vmem>>, %arg5: memref<8x128xf32, #tpu.memory_space<vmem>>) attributes {dimension_semantics = [#tpu.dimension_semantics<parallel>], iteration_bounds = array<i64: 1>, scalar_prefetch = 0 : i64, scratch_operands = 0 : i64, tpu.core_type = #tpu.core_type<tc>, window_params = [{transform_indices = @transform_0, window_bounds = array<i64: 8, 128>}, {pipeline_mode = #tpu.pipeline_mode<synchronous>, transform_indices = @transform_1, window_bounds = array<i64: 128, 128>}, {pipeline_mode = #tpu.pipeline_mode<synchronous>, transform_indices = @transform_2, window_bounds = array<i64: 128, 128>}, {pipeline_mode = #tpu.pipeline_mode<synchronous>, transform_indices = @transform_3, window_bounds = array<i64: 128, 128>}, {transform_indices = @transform_4, window_bounds = array<i64: 8, 128>}]} {
    %c0 = arith.constant 0 : index
    %c0_0 = arith.constant 0 : index
    %0 = vector.load %arg1[%c0, %c0_0] : memref<8x128xf32, #tpu.memory_space<vmem>>, vector<8x128xf32>
    %c0_1 = arith.constant 0 : index
    %c0_2 = arith.constant 0 : index
    %1 = vector.load %arg2[%c0_1, %c0_2] : memref<128x128xf32, #tpu.memory_space<vmem>>, vector<128x128xf32>
    %cst = arith.constant dense<0.000000e+00> : vector<8x128xf32>
    %2 = tpu.matmul %0, %1, %cst {dimension_numbers = #tpu.dot_dimension_numbers<[1], [0], [0], [1], [0, 0, 1, 1], [], []>} : vector<8x128xf32>, vector<128x128xf32>, vector<8x128xf32> -> vector<8x128xf32>
    %c0_3 = arith.constant 0 : index
    %c0_4 = arith.constant 0 : index
    %3 = vector.load %arg3[%c0_3, %c0_4] : memref<128x128xf32, #tpu.memory_space<vmem>>, vector<128x128xf32>
    %cst_5 = arith.constant dense<0.000000e+00> : vector<8x128xf32>
    %4 = tpu.matmul %2, %3, %cst_5 {dimension_numbers = #tpu.dot_dimension_numbers<[1], [0], [0], [1], [0, 0, 1, 1], [], []>} : vector<8x128xf32>, vector<128x128xf32>, vector<8x128xf32> -> vector<8x128xf32>
    %c0_6 = arith.constant 0 : index
    %c0_7 = arith.constant 0 : index
    %5 = vector.load %arg4[%c0_6, %c0_7] : memref<128x128xf32, #tpu.memory_space<vmem>>, vector<128x128xf32>
    %cst_8 = arith.constant dense<0.000000e+00> : vector<8x128xf32>
    %6 = tpu.matmul %4, %5, %cst_8 {dimension_numbers = #tpu.dot_dimension_numbers<[1], [0], [0], [1], [0, 0, 1, 1], [], []>} : vector<8x128xf32>, vector<128x128xf32>, vector<8x128xf32> -> vector<8x128xf32>
    %c0_9 = arith.constant 0 : index
    %c0_10 = arith.constant 0 : index
    %7 = vector.load %arg5[%c0_9, %c0_10] : memref<8x128xf32, #tpu.memory_space<vmem>>, vector<8x128xf32>
    tpu.vector_store %arg5[%c0_9, %c0_10], %6 {strides = array<i32>} : memref<8x128xf32, #tpu.memory_space<vmem>>, vector<8x128xf32>,
    return
  }
  func.func @transform_0(%arg0: i32) -> (i32, i32) {
    %c0_i32 = arith.constant 0 : i32
    %c0_i32_0 = arith.constant 0 : i32
    return %arg0, %c0_i32 : i32, i32
  }
  func.func @transform_1(%arg0: i32) -> (i32, i32) {
    %c0_i32 = arith.constant 0 : i32
    %c0_i32_0 = arith.constant 0 : i32
    %c0_i32_1 = arith.constant 0 : i32
    return %c0_i32, %c0_i32_0 : i32, i32
  }
  func.func @transform_2(%arg0: i32) -> (i32, i32) {
    %c0_i32 = arith.constant 0 : i32
    %c0_i32_0 = arith.constant 0 : i32
    %c0_i32_1 = arith.constant 0 : i32
    return %c0_i32, %c0_i32_0 : i32, i32
  }
  func.func @transform_3(%arg0: i32) -> (i32, i32) {
    %c0_i32 = arith.constant 0 : i32
    %c0_i32_0 = arith.constant 0 : i32
    %c0_i32_1 = arith.constant 0 : i32
    return %c0_i32, %c0_i32_0 : i32, i32
  }
  func.func @transform_4(%arg0: i32) -> (i32, i32) {
    %c0_i32 = arith.constant 0 : i32
    %c0_i32_0 = arith.constant 0 : i32
    return %arg0, %c0_i32 : i32, i32
  }
}

</mosaic_0001>

<llo_original>
// kernel: linear_network_forward.1
$region0: #{linear_network_forward.1}
  #allocation0 [shape = 'u32[]', space=smem, size = 0x4, offset = 0x4, fixed_abs, tag = 'smem constant byte address 0x4 - core index']
  #allocation1 [shape = 'u32[144,128]{1,0:T(1,128)}', space=vmem, size = 0x12000, scoped, tag = 'internal scratch']
  %s0 = inlined_call_operand.vmem [shape: f32[8,128], index: 0, kind: input, shape index: {}]
  %s1 = inlined_call_operand.hbm [shape: f32[128,128], index: 1, kind: input, shape index: {}]
  %s2 = inlined_call_operand.hbm [shape: f32[128,128], index: 2, kind: input, shape index: {}]
  %s3 = inlined_call_operand.hbm [shape: f32[128,128], index: 3, kind: input, shape index: {}]
  %s4 = inlined_call_operand.hbm [shape: f32[8,128], index: 4, kind: output, shape index: {}]
  %s5 = sld [smem:[#allocation0]]
  $region38: #{linear_network_forward.1} parent=0
    _
  %s7 = ssub.s32 1, %s5
  %s8 = scalar_select 0, %s7, %s5
  $region1: #{linear_network_forward.1} parent=0
    #allocation2 [shape = 'u8[65536]{0}', space=vmem, size = 0x10000, scoped, tag = 'input window, operand 1, single buffered']
    #allocation3 [shape = 's32[1]{0}', space=sflag, size = 0x4, scoped, tag = 'scoped memory for linear_network_forward.1']
    #allocation4 [shape = 's32[1]{0}', space=sflag, size = 0x4, scoped, tag = 'scoped memory for linear_network_forward.1']
    #allocation5 [shape = 'u8[65536]{0}', space=vmem, size = 0x10000, scoped, tag = 'input window, operand 2, single buffered']
    #allocation6 [shape = 's32[1]{0}', space=sflag, size = 0x4, scoped, tag = 'scoped memory for linear_network_forward.1']
    #allocation7 [shape = 'u8[65536]{0}', space=vmem, size = 0x10000, scoped, tag = 'input window, operand 3, single buffered']
    #allocation8 [shape = 'u8[4096]{0}', space=vmem, size = 0x1000, scoped, tag = 'output window, operand 0, single buffered']
    %9 = vsyncpa [#allocation3], 0
    %10 = vsyncpa [#allocation6], 0
    %11 = vsyncpa [#allocation4], 0
    // Predicated region
    $region2: #{linear_network_forward.1} parent=1 // pred_check
      _
    $region3: #{linear_network_forward.1} parent=1 // pred_check_branch
      %13 = sbr.rel (0) target = $region5
    $region4: #{linear_network_forward.1} parent=1 // pred_region
      _
    $region5: #{linear_network_forward.1} parent=1 // pred_fallthru
      _
    // Predicated region
    $region6: #{linear_network_forward.1} parent=1 // pred_check
      _
    $region7: #{linear_network_forward.1} parent=1 // pred_check_branch
      %15 = sbr.rel (0) target = $region9
    $region8: #{linear_network_forward.1} parent=1 // pred_region
      %s17 = ssub.s32 2048, 2048
      %18 = vsyncadd [#allocation3], %s17
      %s19 = sshll.u32 [#allocation2], 4
      %s20 = int_to_ptr.vmem [resolvable:$true] %s19
      %25 = dma.hbm_to_vmem [thread:$0]  %s1, 2048, %s20, [#allocation3], 128, 128, 8
    $region9: #{linear_network_forward.1} parent=1 // pred_fallthru
      _
    // Predicated region
    $region10: #{linear_network_forward.1} parent=1 // pred_check
      _
    $region11: #{linear_network_forward.1} parent=1 // pred_check_branch
      %27 = sbr.rel (0) target = $region13
    $region12: #{linear_network_forward.1} parent=1 // pred_region
      %s29 = ssub.s32 2048, 2048
      %30 = vsyncadd [#allocation6], %s29
      %s31 = sshll.u32 [#allocation5], 4
      %s32 = int_to_ptr.vmem [resolvable:$true] %s31
      %37 = dma.hbm_to_vmem [thread:$0]  %s2, 2048, %s32, [#allocation6], 128, 128, 8
    $region13: #{linear_network_forward.1} parent=1 // pred_fallthru
      _
    // Predicated region
    $region14: #{linear_network_forward.1} parent=1 // pred_check
      _
    $region15: #{linear_network_forward.1} parent=1 // pred_check_branch
      %39 = sbr.rel (0) target = $region17
    $region16: #{linear_network_forward.1} parent=1 // pred_region
      %s41 = ssub.s32 2048, 2048
      %42 = vsyncadd [#allocation6], %s41
      %s43 = sshll.u32 [#allocation7], 4
      %s44 = int_to_ptr.vmem [resolvable:$true] %s43
      %49 = dma.hbm_to_vmem [thread:$0]  %s3, 2048, %s44, [#allocation6], 128, 128, 8
    $region17: #{linear_network_forward.1} parent=1 // pred_fallthru
      _
    // Predicated region
    $region18: #{linear_network_forward.1} parent=1 // pred_check
      _
    $region19: #{linear_network_forward.1} parent=1 // pred_check_branch
      %51 = sbr.rel (0) target = $region21
    $region20: #{linear_network_forward.1} parent=1 // pred_region
      %52 = dma.done [#allocation3], 2048
    $region21: #{linear_network_forward.1} parent=1 // pred_fallthru
      _
    // Predicated region
    $region22: #{linear_network_forward.1} parent=1 // pred_check
      _
    $region23: #{linear_network_forward.1} parent=1 // pred_check_branch
      %54 = sbr.rel (0) target = $region25
    $region24: #{linear_network_forward.1} parent=1 // pred_region
      %55 = dma.done [#allocation6], 2048
    $region25: #{linear_network_forward.1} parent=1 // pred_fallthru
      _
    // Predicated region
    $region26: #{linear_network_forward.1} parent=1 // pred_check
      _
    $region27: #{linear_network_forward.1} parent=1 // pred_check_branch
      %57 = sbr.rel (0) target = $region29
    $region28: #{linear_network_forward.1} parent=1 // pred_region
      %58 = dma.done [#allocation6], 2048
    $region29: #{linear_network_forward.1} parent=1 // pred_fallthru
      _
    %v59 = vld [vmem:[%s0] sm:$0xff]
    %v60 = vld [vmem:[#allocation2] sm:$0xff]
    %v61 = vld [vmem:[#allocation2 + $0x8] sm:$0xff]
    %v62 = vld [vmem:[#allocation2 + $0x10] sm:$0xff]
    %v63 = vld [vmem:[#allocation2 + $0x18] sm:$0xff]
    %v64 = vld [vmem:[#allocation2 + $0x20] sm:$0xff]
    %v65 = vld [vmem:[#allocation2 + $0x28] sm:$0xff]
    %v66 = vld [vmem:[#allocation2 + $0x30] sm:$0xff]
    %v67 = vld [vmem:[#allocation2 + $0x38] sm:$0xff]
    %v68 = vld [vmem:[#allocation2 + $0x40] sm:$0xff]
    %v69 = vld [vmem:[#allocation2 + $0x48] sm:$0xff]
    %v70 = vld [vmem:[#allocation2 + $0x50] sm:$0xff]
    %v71 = vld [vmem:[#allocation2 + $0x58] sm:$0xff]
    %v72 = vld [vmem:[#allocation2 + $0x60] sm:$0xff]
    %v73 = vld [vmem:[#allocation2 + $0x68] sm:$0xff]
    %v74 = vld [vmem:[#allocation2 + $0x70] sm:$0xff]
    %v75 = vld [vmem:[#allocation2 + $0x78] sm:$0xff]
    %76 = vmatprep.subr.mxu0 0.0
    %77 = vmatpush1.msra.mxu0 %v60
    %78 = vmatprep.subr.mxu0 0.0
    %79 = vmatpush1.msra.mxu0 %v61
    %80 = vmatprep.subr.mxu0 0.0
    %81 = vmatpush1.msra.mxu0 %v62
    %82 = vmatprep.subr.mxu0 0.0
    %83 = vmatpush1.msra.mxu0 %v63
    %84 = vmatprep.subr.mxu0 0.0
    %85 = vmatpush1.msra.mxu0 %v64
    %86 = vmatprep.subr.mxu0 0.0
    %87 = vmatpush1.msra.mxu0 %v65
    %88 = vmatprep.subr.mxu0 0.0
    %89 = vmatpush1.msra.mxu0 %v66
    %90 = vmatprep.subr.mxu0 0.0
    %91 = vmatpush1.msra.mxu0 %v67
    %92 = vmatprep.subr.mxu0 0.0
    %93 = vmatpush1.msra.mxu0 %v68
    %94 = vmatprep.subr.mxu0 0.0
    %95 = vmatpush1.msra.mxu0 %v69
    %96 = vmatprep.subr.mxu0 0.0
    %97 = vmatpush1.msra.mxu0 %v70
    %98 = vmatprep.subr.mxu0 0.0
    %99 = vmatpush1.msra.mxu0 %v71
    %100 = vmatprep.subr.mxu0 0.0
    %101 = vmatpush1.msra.mxu0 %v72
    %102 = vmatprep.subr.mxu0 0.0
    %103 = vmatpush1.msra.mxu0 %v73
    %104 = vmatprep.subr.mxu0 0.0
    %105 = vmatpush1.msra.mxu0 %v74
    %106 = vmatprep.subr.mxu0 0.0
    %107 = vmatpush1.msra.mxu0 %v75
    %108 = vmatprep.subr.mxu0 0.0
    %109 = vmatpush1.msra.mxu0 0.0
    %110 = vmatprep.subr.mxu0 0.0
    %111 = vmatpush1.msra.mxu0 0.0
    %112 = vmatprep.subr.mxu0 0.0
    %113 = vmatpush1.msra.mxu0 0.0
    %114 = vmatprep.subr.mxu0 0.0
    %115 = vmatpush1.msra.mxu0 0.0
    %116 = vmatprep.subr.mxu0 0.0
    %117 = vmatpush1.msra.mxu0 0.0
    %118 = vmatprep.subr.mxu0 0.0
    %119 = vmatpush1.msra.mxu0 0.0
    %120 = vmatprep.subr.mxu0 0.0
    %121 = vmatpush1.msra.mxu0 0.0
    %122 = vmatprep.subr.mxu0 0.0
    %123 = vmatpush1.msra.mxu0 0.0
    %124 = vmatprep.subr.mxu0 0.0
    %125 = vmatpush1.msra.mxu0 0.0
    %126 = vmatprep.subr.mxu0 0.0
    %127 = vmatpush1.msra.mxu0 0.0
    %128 = vmatprep.subr.mxu0 0.0
    %129 = vmatpush1.msra.mxu0 0.0
    %130 = vmatprep.subr.mxu0 0.0
    %131 = vmatpush1.msra.mxu0 0.0
    %132 = vmatprep.subr.mxu0 0.0
    %133 = vmatpush1.msra.mxu0 0.0
    %134 = vmatprep.subr.mxu0 0.0
    %135 = vmatpush1.msra.mxu0 0.0
    %136 = vmatprep.subr.mxu0 0.0
    %137 = vmatpush1.msra.mxu0 0.0
    %138 = vmatprep.subr.mxu0 0.0
    %139 = vmatpush1.msra.mxu0 0.0
    %140 = vmatprep.mubr.f32.mxu0 0.0
    %141 = vmatmul.mubr.f32.gmra.mrb[0].mxu0 %v59
    %v142 = vpop.f32.mrb[0].mxu0
    %v143 = vadd.f32 0.0, %v142
    %v144 = vpop.f32.mrb[0].mxu0
    %145 = vdwg.mxu0
    %v146 = vld [vmem:[#allocation5] sm:$0xff]
    %v147 = vld [vmem:[#allocation5 + $0x8] sm:$0xff]
    %v148 = vld [vmem:[#allocation5 + $0x10] sm:$0xff]
    %v149 = vld [vmem:[#allocation5 + $0x18] sm:$0xff]
    %v150 = vld [vmem:[#allocation5 + $0x20] sm:$0xff]
    %v151 = vld [vmem:[#allocation5 + $0x28] sm:$0xff]
    %v152 = vld [vmem:[#allocation5 + $0x30] sm:$0xff]
    %v153 = vld [vmem:[#allocation5 + $0x38] sm:$0xff]
    %v154 = vld [vmem:[#allocation5 + $0x40] sm:$0xff]
    %v155 = vld [vmem:[#allocation5 + $0x48] sm:$0xff]
    %v156 = vld [vmem:[#allocation5 + $0x50] sm:$0xff]
    %v157 = vld [vmem:[#allocation5 + $0x58] sm:$0xff]
    %v158 = vld [vmem:[#allocation5 + $0x60] sm:$0xff]
    %v159 = vld [vmem:[#allocation5 + $0x68] sm:$0xff]
    %v160 = vld [vmem:[#allocation5 + $0x70] sm:$0xff]
    %v161 = vld [vmem:[#allocation5 + $0x78] sm:$0xff]
    %162 = vmatprep.subr.mxu0 0.0
    %163 = vmatpush1.msra.mxu0 %v146
    %164 = vmatprep.subr.mxu0 0.0
    %165 = vmatpush1.msra.mxu0 %v147
    %166 = vmatprep.subr.mxu0 0.0
    %167 = vmatpush1.msra.mxu0 %v148
    %168 = vmatprep.subr.mxu0 0.0
    %169 = vmatpush1.msra.mxu0 %v149
    %170 = vmatprep.subr.mxu0 0.0
    %171 = vmatpush1.msra.mxu0 %v150
    %172 = vmatprep.subr.mxu0 0.0
    %173 = vmatpush1.msra.mxu0 %v151
    %174 = vmatprep.subr.mxu0 0.0
    %175 = vmatpush1.msra.mxu0 %v152
    %176 = vmatprep.subr.mxu0 0.0
    %177 = vmatpush1.msra.mxu0 %v153
    %178 = vmatprep.subr.mxu0 0.0
    %179 = vmatpush1.msra.mxu0 %v154
    %180 = vmatprep.subr.mxu0 0.0
    %181 = vmatpush1.msra.mxu0 %v155
    %182 = vmatprep.subr.mxu0 0.0
    %183 = vmatpush1.msra.mxu0 %v156
    %184 = vmatprep.subr.mxu0 0.0
    %185 = vmatpush1.msra.mxu0 %v157
    %186 = vmatprep.subr.mxu0 0.0
    %187 = vmatpush1.msra.mxu0 %v158
    %188 = vmatprep.subr.mxu0 0.0
    %189 = vmatpush1.msra.mxu0 %v159
    %190 = vmatprep.subr.mxu0 0.0
    %191 = vmatpush1.msra.mxu0 %v160
    %192 = vmatprep.subr.mxu0 0.0
    %193 = vmatpush1.msra.mxu0 %v161
    %194 = vmatprep.subr.mxu0 0.0
    %195 = vmatpush1.msra.mxu0 0.0
    %196 = vmatprep.subr.mxu0 0.0
    %197 = vmatpush1.msra.mxu0 0.0
    %198 = vmatprep.subr.mxu0 0.0
    %199 = vmatpush1.msra.mxu0 0.0
    %200 = vmatprep.subr.mxu0 0.0
    %201 = vmatpush1.msra.mxu0 0.0
    %202 = vmatprep.subr.mxu0 0.0
    %203 = vmatpush1.msra.mxu0 0.0
    %204 = vmatprep.subr.mxu0 0.0
    %205 = vmatpush1.msra.mxu0 0.0
    %206 = vmatprep.subr.mxu0 0.0
    %207 = vmatpush1.msra.mxu0 0.0
    %208 = vmatprep.subr.mxu0 0.0
    %209 = vmatpush1.msra.mxu0 0.0
    %210 = vmatprep.subr.mxu0 0.0
    %211 = vmatpush1.msra.mxu0 0.0
    %212 = vmatprep.subr.mxu0 0.0
    %213 = vmatpush1.msra.mxu0 0.0
    %214 = vmatprep.subr.mxu0 0.0
    %215 = vmatpush1.msra.mxu0 0.0
    %216 = vmatprep.subr.mxu0 0.0
    %217 = vmatpush1.msra.mxu0 0.0
    %218 = vmatprep.subr.mxu0 0.0
    %219 = vmatpush1.msra.mxu0 0.0
    %220 = vmatprep.subr.mxu0 0.0
    %221 = vmatpush1.msra.mxu0 0.0
    %222 = vmatprep.subr.mxu0 0.0
    %223 = vmatpush1.msra.mxu0 0.0
    %224 = vmatprep.subr.mxu0 0.0
    %225 = vmatpush1.msra.mxu0 0.0
    %226 = vmatprep.mubr.f32.mxu0 0.0
    %227 = vmatmul.mubr.f32.gmra.mrb[0].mxu0 %v143
    %v228 = vpop.f32.mrb[0].mxu0
    %v229 = vadd.f32 0.0, %v228
    %v230 = vpop.f32.mrb[0].mxu0
    %231 = vdwg.mxu0
    %v232 = vld [vmem:[#allocation7] sm:$0xff]
    %v233 = vld [vmem:[#allocation7 + $0x8] sm:$0xff]
    %v234 = vld [vmem:[#allocation7 + $0x10] sm:$0xff]
    %v235 = vld [vmem:[#allocation7 + $0x18] sm:$0xff]
    %v236 = vld [vmem:[#allocation7 + $0x20] sm:$0xff]
    %v237 = vld [vmem:[#allocation7 + $0x28] sm:$0xff]
    %v238 = vld [vmem:[#allocation7 + $0x30] sm:$0xff]
    %v239 = vld [vmem:[#allocation7 + $0x38] sm:$0xff]
    %v240 = vld [vmem:[#allocation7 + $0x40] sm:$0xff]
    %v241 = vld [vmem:[#allocation7 + $0x48] sm:$0xff]
    %v242 = vld [vmem:[#allocation7 + $0x50] sm:$0xff]
    %v243 = vld [vmem:[#allocation7 + $0x58] sm:$0xff]
    %v244 = vld [vmem:[#allocation7 + $0x60] sm:$0xff]
    %v245 = vld [vmem:[#allocation7 + $0x68] sm:$0xff]
    %v246 = vld [vmem:[#allocation7 + $0x70] sm:$0xff]
    %v247 = vld [vmem:[#allocation7 + $0x78] sm:$0xff]
    %248 = vmatprep.subr.mxu0 0.0
    %249 = vmatpush1.msra.mxu0 %v232
    %250 = vmatprep.subr.mxu0 0.0
    %251 = vmatpush1.msra.mxu0 %v233
    %252 = vmatprep.subr.mxu0 0.0
    %253 = vmatpush1.msra.mxu0 %v234
    %254 = vmatprep.subr.mxu0 0.0
    %255 = vmatpush1.msra.mxu0 %v235
    %256 = vmatprep.subr.mxu0 0.0
    %257 = vmatpush1.msra.mxu0 %v236
    %258 = vmatprep.subr.mxu0 0.0
    %259 = vmatpush1.msra.mxu0 %v237
    %260 = vmatprep.subr.mxu0 0.0
    %261 = vmatpush1.msra.mxu0 %v238
    %262 = vmatprep.subr.mxu0 0.0
    %263 = vmatpush1.msra.mxu0 %v239
    %264 = vmatprep.subr.mxu0 0.0
    %265 = vmatpush1.msra.mxu0 %v240
    %266 = vmatprep.subr.mxu0 0.0
    %267 = vmatpush1.msra.mxu0 %v241
    %268 = vmatprep.subr.mxu0 0.0
    %269 = vmatpush1.msra.mxu0 %v242
    %270 = vmatprep.subr.mxu0 0.0
    %271 = vmatpush1.msra.mxu0 %v243
    %272 = vmatprep.subr.mxu0 0.0
    %273 = vmatpush1.msra.mxu0 %v244
    %274 = vmatprep.subr.mxu0 0.0
    %275 = vmatpush1.msra.mxu0 %v245
    %276 = vmatprep.subr.mxu0 0.0
    %277 = vmatpush1.msra.mxu0 %v246
    %278 = vmatprep.subr.mxu0 0.0
    %279 = vmatpush1.msra.mxu0 %v247
    %280 = vmatprep.subr.mxu0 0.0
    %281 = vmatpush1.msra.mxu0 0.0
    %282 = vmatprep.subr.mxu0 0.0
    %283 = vmatpush1.msra.mxu0 0.0
    %284 = vmatprep.subr.mxu0 0.0
    %285 = vmatpush1.msra.mxu0 0.0
    %286 = vmatprep.subr.mxu0 0.0
    %287 = vmatpush1.msra.mxu0 0.0
    %288 = vmatprep.subr.mxu0 0.0
    %289 = vmatpush1.msra.mxu0 0.0
    %290 = vmatprep.subr.mxu0 0.0
    %291 = vmatpush1.msra.mxu0 0.0
    %292 = vmatprep.subr.mxu0 0.0
    %293 = vmatpush1.msra.mxu0 0.0
    %294 = vmatprep.subr.mxu0 0.0
    %295 = vmatpush1.msra.mxu0 0.0
    %296 = vmatprep.subr.mxu0 0.0
    %297 = vmatpush1.msra.mxu0 0.0
    %298 = vmatprep.subr.mxu0 0.0
    %299 = vmatpush1.msra.mxu0 0.0
    %300 = vmatprep.subr.mxu0 0.0
    %301 = vmatpush1.msra.mxu0 0.0
    %302 = vmatprep.subr.mxu0 0.0
    %303 = vmatpush1.msra.mxu0 0.0
    %304 = vmatprep.subr.mxu0 0.0
    %305 = vmatpush1.msra.mxu0 0.0
    %306 = vmatprep.subr.mxu0 0.0
    %307 = vmatpush1.msra.mxu0 0.0
    %308 = vmatprep.subr.mxu0 0.0
    %309 = vmatpush1.msra.mxu0 0.0
    %310 = vmatprep.subr.mxu0 0.0
    %311 = vmatpush1.msra.mxu0 0.0
    %312 = vmatprep.mubr.f32.mxu0 0.0
    %313 = vmatmul.mubr.f32.gmra.mrb[0].mxu0 %v229
    %v314 = vpop.f32.mrb[0].mxu0
    %v315 = vadd.f32 0.0, %v314
    %v316 = vpop.f32.mrb[0].mxu0
    %317 = vdwg.mxu0
    %318 = vst [vmem:[#allocation8] sm:$0xff] %v315
    // Predicated region
    $region30: #{linear_network_forward.1} parent=1 // pred_check
      _
    $region31: #{linear_network_forward.1} parent=1 // pred_check_branch
      %320 = sbr.rel (0) target = $region33
    $region32: #{linear_network_forward.1} parent=1 // pred_region
      %s322 = ssub.s32 128, 128
      %323 = vsyncadd [#allocation4], %s322
      %s325 = sshll.u32 [#allocation8], 4
      %s326 = int_to_ptr.vmem [resolvable:$true] %s325
      %328 = dma.vmem_to_hbm [thread:$0]  %s326, 128, %s4, [#allocation4]
    $region33: #{linear_network_forward.1} parent=1 // pred_fallthru
      _
    // Predicated region
    $region34: #{linear_network_forward.1} parent=1 // pred_check
      _
    $region35: #{linear_network_forward.1} parent=1 // pred_check_branch
      %330 = sbr.rel (0) target = $region37
    $region36: #{linear_network_forward.1} parent=1 // pred_region
      %331 = dma.done [#allocation4], 128
    $region37: #{linear_network_forward.1} parent=1 // pred_fallthru
      _
    %332 = vsyncpa [#allocation3], 1
    %333 = vsyncpa [#allocation6], 1
    %334 = vsyncpa [#allocation4], 1

</llo_original>
